<compile_context>
chip_gen: v6e
topology: v6e:2x2x1
jax: 0.10.0
libtpu: 0.0.40
codegen_flags: <defaults>
</compile_context>

<pallas_src>
import jax
import jax.numpy as jnp
from jax.experimental import pallas as pl
from jax.experimental.pallas import tpu as pltpu


def _round_up(x, m):
    return ((x + m - 1) // m) * m


# ---------------- Pass 1 (the only Pallas pass) ----------------
# conv = patches @ W on the MXU (bf16 x bf16 -> f32), stored bf16, plus per-channel
# sum / sum-of-squares accumulated into resident (1, 8, Cp) f32 blocks (one per core).
def _conv_stats_kernel(p_ref, w_ref, conv_ref, sum_ref, ssq_ref):
    @pl.when(pl.program_id(1) == 0)       # first M-tile of this core: zero the accumulators
    def _():
        sum_ref[...] = jnp.zeros_like(sum_ref)
        ssq_ref[...] = jnp.zeros_like(ssq_ref)

    # NOTE: no ReLU here -- the wrapper ReLUs x before im2col (review item 1).
    conv = jnp.dot(p_ref[...], w_ref[...], preferred_element_type=jnp.float32)
    conv_ref[...] = conv.astype(conv_ref.dtype)     # bf16 store: halves HBM write traffic

    # Sublane-aligned partial stats: reshape (TM, Cp) -> (TM//8, 8, Cp) and reduce the
    # leading axis -> only VPU adds, no cross-sublane (XLU) reduction in the hot loop.
    tm, cp = conv.shape
    c3 = conv.reshape(tm // 8, 8, cp)
    sum_ref[...] += jnp.sum(c3, axis=0)[None]
    ssq_ref[...] += jnp.sum(c3 * c3, axis=0)[None]


def down_sampling_block(x, conv_w, conv_b, bn_gamma, bn_beta,
                        *, stride=2, pad=1, eps=1e-5, tile_m=1024):
    """x: (N, C_in, H, W) NCHW f32. conv_w: (C_out, C_in, KH, KW). Returns (N, C_out, OH, OW)."""
    N, C_in, H, W = x.shape
    C_out, _, KH, KW = conv_w.shape
    OH = (H + 2 * pad - KH) // stride + 1
    OW = (W + 2 * pad - KW) // stride + 1
    M = N * OH * OW
    K = C_in * KH * KW

    # conv_b intentionally unused: cancelled exactly by the training-mode BN mean
    # subtraction (proved against the bias-keeping reference in __main__).
    del conv_b

    # ---- im2col glue (ReLU'd NHWC, bf16). Feature order along K is (kh, kw, c_in). ----
    xh = jnp.transpose(jnp.maximum(x, 0.0), (0, 2, 3, 1)).astype(jnp.bfloat16)
    xp = jnp.pad(xh, ((0, 0), (pad, pad), (pad, pad), (0, 0)))
    cols = []
    for kh in range(KH):
        for kw in range(KW):
            cols.append(xp[:, kh:kh + stride * OH:stride, kw:kw + stride * OW:stride, :])
    patches = jnp.concatenate(cols, axis=-1).reshape(M, K)

    # Weight (C_out, C_in, KH, KW) -> (KH, KW, C_in, C_out) -> (K, C_out), matching order.
    w2d = conv_w.transpose(2, 3, 1, 0).reshape(K, C_out).astype(jnp.bfloat16)

    # ---- alignment: lane-dense C (pad to 128); K left unpadded (full-dim block is exempt) ----
    Cp = _round_up(C_out, 128)
    w2d = jnp.pad(w2d, ((0, 0), (0, Cp - C_out)))

    # ---- M tiling: keep the double-buffered working set under a conservative budget ----
    TM = min(_round_up(tile_m, 8), _round_up(M, 8))
    budget = 16 * 1024 * 1024            # fits every chip's scoped-VMEM with vmem_limit below

    def _vmem_bytes(tm):
        return (2 * tm * K * 2           # patches tile (bf16, double-buffered)
                + 2 * K * Cp * 2         # resident weight (bf16; Pallas still allocs 2 bufs)
                + 2 * tm * Cp * 2        # conv output tile (bf16, double-buffered)
                + 4 * 8 * Cp * 4)        # stat accumulators (f32)

    while TM > 128 and _vmem_bytes(TM) > budget:
        TM //= 2
    TM = _round_up(TM, 8)

    n_tiles = pl.cdiv(M, TM)
    num_cores = 2 if n_tiles >= 2 else 1          # v7x: shard the M axis across both TCs
    n_half = pl.cdiv(n_tiles, num_cores)
    Mp = num_cores * n_half * TM
    patches = jnp.pad(patches, ((0, Mp - M), (0, 0)))   # zero rows -> zero conv -> zero stats

    conv_pad, ch_sum, ch_ssq = pl.pallas_call(
        _conv_stats_kernel,
        out_shape=(
            jax.ShapeDtypeStruct((Mp, Cp), jnp.bfloat16),          # conv activation (bf16)
            jax.ShapeDtypeStruct((num_cores, 8, Cp), jnp.float32),  # per-core partial sums
            jax.ShapeDtypeStruct((num_cores, 8, Cp), jnp.float32),  # per-core partial sum-sq
        ),
        grid=(num_cores, n_half),
        in_specs=[
            pl.BlockSpec((TM, K), lambda c, i: (c * n_half + i, 0)),   # patches tile
            pl.BlockSpec((K, Cp), lambda c, i: (0, 0)),                # weight stays resident
        ],
        out_specs=(
            pl.BlockSpec((TM, Cp), lambda c, i: (c * n_half + i, 0)),
            pl.BlockSpec((1, 8, Cp), lambda c, i: (c, 0, 0)),          # resident accumulator
            pl.BlockSpec((1, 8, Cp), lambda c, i: (c, 0, 0)),          # resident accumulator
        ),
        compiler_params=pltpu.CompilerParams(
            dimension_semantics=("parallel", "arbitrary"),  # core split / M-accumulation
            vmem_limit_bytes=32 * 1024 * 1024,
        ),
    )(patches, w2d)

    # ---- XLA glue: BN stats -> per-channel scale/shift; affine fused into the epilogue ----
    # Padded M rows and padded channels contribute exact zeros, so dividing by the true M
    # is correct and the extra channels are simply sliced away.
    inv_m = 1.0 / float(M)
    s = jnp.sum(ch_sum, axis=(0, 1))[:C_out]
    ss = jnp.sum(ch_ssq, axis=(0, 1))[:C_out]
    mean = s * inv_m
    # E[x^2]-E[x]^2 in f32; clamp guards tiny negatives from cancellation (see review note).
    var = jnp.maximum(ss * inv_m - mean * mean, 0.0)
    inv_std = jax.lax.rsqrt(var + eps)
    scale = bn_gamma.astype(jnp.float32) * inv_std
    shift = bn_beta.astype(jnp.float32) - mean * scale

    conv = conv_pad[:M, :C_out].astype(jnp.float32)
    out = conv * scale[None, :] + shift[None, :]          # fused by XLA into the transpose
    return out.reshape(N, OH, OW, C_out).transpose(0, 3, 1, 2).astype(x.dtype)


def _reference(x, conv_w, conv_b, bn_gamma, bn_beta, *, stride=2, pad=1, eps=1e-5,
               mimic_kernel_rounding=False):
    """Pure-JAX reference matching PyTorch semantics (training-mode BN, conv bias kept).

    mimic_kernel_rounding=True reproduces the kernel's numerics exactly: bf16 operands,
    bf16-rounded stored activation (f32 stats), and no conv bias (it cancels anyway)."""
    xr = jnp.maximum(x.astype(jnp.float32), 0.0)
    w = conv_w.astype(jnp.float32)
    if mimic_kernel_rounding:
        xr = xr.astype(jnp.bfloat16).astype(jnp.float32)
        w = w.astype(jnp.bfloat16).astype(jnp.float32)
    conv = jax.lax.conv_general_dilated(
        xr, w, window_strides=(stride, stride), padding=[(pad, pad), (pad, pad)],
        dimension_numbers=("NCHW", "OIHW", "NCHW"))
    if not mimic_kernel_rounding:
        conv = conv + conv_b.reshape(1, -1, 1, 1).astype(jnp.float32)
    mean = jnp.mean(conv, axis=(0, 2, 3), keepdims=True)
    var = jnp.mean((conv - mean) ** 2, axis=(0, 2, 3), keepdims=True)
    conv_applied = conv
    if mimic_kernel_rounding:
        conv_applied = conv.astype(jnp.bfloat16).astype(jnp.float32)
    out = (conv_applied - mean) * jax.lax.rsqrt(var + eps)
    out = out * bn_gamma.reshape(1, -1, 1, 1) + bn_beta.reshape(1, -1, 1, 1)
    return out.astype(x.dtype)


if __name__ == "__main__":
    # Small deterministic example: batch=2, in_channel=4, out_channel=8, spatial=16x16.
    key = jax.random.PRNGKey(0)
    k_x, k_w, k_b, k_g, k_be = jax.random.split(key, 5)

    N, C_in, C_out, H, W = 2, 4, 8, 16, 16
    KH = KW = 4

    x = jax.random.normal(k_x, (N, C_in, H, W), dtype=jnp.float32)
    conv_w = jax.random.normal(k_w, (C_out, C_in, KH, KW), dtype=jnp.float32) * 0.1
    conv_b = jax.random.normal(k_b, (C_out,), dtype=jnp.float32) * 0.1
    bn_gamma = 1.0 + 0.1 * jax.random.normal(k_g, (C_out,), dtype=jnp.float32)
    bn_beta = 0.1 * jax.random.normal(k_be, (C_out,), dtype=jnp.float32)

    out = jax.jit(down_sampling_block)(x, conv_w, conv_b, bn_gamma, bn_beta)
    out = jax.block_until_ready(out)
    assert out.shape == (N, C_out, H // 2, W // 2), out.shape

    # Tight check vs. a reference that mirrors the kernel's bf16 rounding exactly.
    ref_bf16 = _reference(x, conv_w, conv_b, bn_gamma, bn_beta, mimic_kernel_rounding=True)
    assert jnp.allclose(out, ref_bf16, atol=2e-3, rtol=2e-3), \
        float(jnp.max(jnp.abs(out - ref_bf16)))

    # Coarse check vs. full-f32 PyTorch semantics WITH the conv bias (only bf16 rounding
    # differs; also proves the dropped bias is cancelled by training-mode BN).
    ref_f32 = _reference(x, conv_w, conv_b, bn_gamma, bn_beta)
    assert jnp.allclose(out, ref_f32, atol=8e-2, rtol=8e-2), \
        float(jnp.max(jnp.abs(out - ref_f32)))

    print("KERNEL_OK")
</pallas_src>

<mosaic_0001>
module attributes {stable_mosaic.version = 11 : i64} {
  func.func @_conv_stats_kernel(%arg0: i32, %arg1: i32, %arg2: memref<128x64xbf16, #tpu.memory_space<vmem>>, %arg3: memref<64x128xbf16, #tpu.memory_space<vmem>>, %arg4: memref<128x128xbf16, #tpu.memory_space<vmem>>, %arg5: memref<1x8x128xf32, #tpu.memory_space<vmem>>, %arg6: memref<1x8x128xf32, #tpu.memory_space<vmem>>) attributes {dimension_semantics = [#tpu.dimension_semantics<parallel>, #tpu.dimension_semantics<arbitrary>], iteration_bounds = array<i64: 1, 1>, scalar_prefetch = 0 : i64, scratch_operands = 0 : i64, tpu.core_type = #tpu.core_type<tc>, window_params = [{transform_indices = @transform_0, window_bounds = array<i64: 128, 64>}, {pipeline_mode = #tpu.pipeline_mode<synchronous>, transform_indices = @transform_1, window_bounds = array<i64: 64, 128>}, {transform_indices = @transform_2, window_bounds = array<i64: 128, 128>}, {transform_indices = @transform_3, window_bounds = array<i64: 1, 8, 128>}, {transform_indices = @transform_4, window_bounds = array<i64: 1, 8, 128>}]} {
    %c0_i32 = arith.constant 0 : i32
    %0 = arith.cmpi eq, %arg1, %c0_i32 : i32
    %1 = arith.extui %0 : i1 to i32
    %c0_i32_0 = arith.constant 0 : i32
    %2 = arith.cmpi ne, %1, %c0_i32_0 : i32
    scf.if %2 {
      %cst_20 = arith.constant 0.000000e+00 : f32
      %20 = vector.broadcast %cst_20 : f32 to vector<1x8x128xf32>
      %c0_21 = arith.constant 0 : index
      %c0_22 = arith.constant 0 : index
      %c0_23 = arith.constant 0 : index
      %21 = vector.load %arg5[%c0_21, %c0_22, %c0_23] : memref<1x8x128xf32, #tpu.memory_space<vmem>>, vector<1x8x128xf32>
      tpu.vector_store %arg5[%c0_21, %c0_22, %c0_23], %20 {strides = array<i32>} : memref<1x8x128xf32, #tpu.memory_space<vmem>>, vector<1x8x128xf32>,
      %cst_24 = arith.constant 0.000000e+00 : f32
      %22 = vector.broadcast %cst_24 : f32 to vector<1x8x128xf32>
      %c0_25 = arith.constant 0 : index
      %c0_26 = arith.constant 0 : index
      %c0_27 = arith.constant 0 : index
      %23 = vector.load %arg6[%c0_25, %c0_26, %c0_27] : memref<1x8x128xf32, #tpu.memory_space<vmem>>, vector<1x8x128xf32>
      tpu.vector_store %arg6[%c0_25, %c0_26, %c0_27], %22 {strides = array<i32>} : memref<1x8x128xf32, #tpu.memory_space<vmem>>, vector<1x8x128xf32>,
    } else {
    }
    %c0 = arith.constant 0 : index
    %c0_1 = arith.constant 0 : index
    %3 = vector.load %arg2[%c0, %c0_1] : memref<128x64xbf16, #tpu.memory_space<vmem>>, vector<128x64xbf16>
    %c0_2 = arith.constant 0 : index
    %c0_3 = arith.constant 0 : index
    %4 = vector.load %arg3[%c0_2, %c0_3] : memref<64x128xbf16, #tpu.memory_space<vmem>>, vector<64x128xbf16>
    %cst = arith.constant dense<0.000000e+00> : vector<128x128xf32>
    %5 = tpu.matmul %3, %4, %cst {dimension_numbers = #tpu.dot_dimension_numbers<[1], [0], [0], [1], [0, 0, 1, 1], [], []>} : vector<128x64xbf16>, vector<64x128xbf16>, vector<128x128xf32> -> vector<128x128xf32>
    %6 = arith.truncf %5 : vector<128x128xf32> to vector<128x128xbf16>
    %c0_4 = arith.constant 0 : index
    %c0_5 = arith.constant 0 : index
    %7 = vector.load %arg4[%c0_4, %c0_5] : memref<128x128xbf16, #tpu.memory_space<vmem>>, vector<128x128xbf16>
    tpu.vector_store %arg4[%c0_4, %c0_5], %6 {strides = array<i32>} : memref<128x128xbf16, #tpu.memory_space<vmem>>, vector<128x128xbf16>,
    %8 = vector.shape_cast %5 : vector<128x128xf32> to vector<16x8x128xf32>
    %c0_6 = arith.constant 0 : index
    %c0_7 = arith.constant 0 : index
    %c0_8 = arith.constant 0 : index
    %9 = vector.load %arg5[%c0_6, %c0_7, %c0_8] : memref<1x8x128xf32, #tpu.memory_space<vmem>>, vector<1x8x128xf32>
    %cst_9 = arith.constant dense<0.000000e+00> : vector<8x128xf32>
    %10 = vector.multi_reduction <add>, %8, %cst_9 [0] : vector<16x8x128xf32> to vector<8x128xf32>
    %11 = vector.shape_cast %10 : vector<8x128xf32> to vector<1x8x128xf32>
    %12 = arith.addf %9, %11 : vector<1x8x128xf32>
    %c0_10 = arith.constant 0 : index
    %c0_11 = arith.constant 0 : index
    %c0_12 = arith.constant 0 : index
    %13 = vector.load %arg5[%c0_10, %c0_11, %c0_12] : memref<1x8x128xf32, #tpu.memory_space<vmem>>, vector<1x8x128xf32>
    tpu.vector_store %arg5[%c0_10, %c0_11, %c0_12], %12 {strides = array<i32>} : memref<1x8x128xf32, #tpu.memory_space<vmem>>, vector<1x8x128xf32>,
    %c0_13 = arith.constant 0 : index
    %c0_14 = arith.constant 0 : index
    %c0_15 = arith.constant 0 : index
    %14 = vector.load %arg6[%c0_13, %c0_14, %c0_15] : memref<1x8x128xf32, #tpu.memory_space<vmem>>, vector<1x8x128xf32>
    %15 = arith.mulf %8, %8 : vector<16x8x128xf32>
    %cst_16 = arith.constant dense<0.000000e+00> : vector<8x128xf32>
    %16 = vector.multi_reduction <add>, %15, %cst_16 [0] : vector<16x8x128xf32> to vector<8x128xf32>
    %17 = vector.shape_cast %16 : vector<8x128xf32> to vector<1x8x128xf32>
    %18 = arith.addf %14, %17 : vector<1x8x128xf32>
    %c0_17 = arith.constant 0 : index
    %c0_18 = arith.constant 0 : index
    %c0_19 = arith.constant 0 : index
    %19 = vector.load %arg6[%c0_17, %c0_18, %c0_19] : memref<1x8x128xf32, #tpu.memory_space<vmem>>, vector<1x8x128xf32>
    tpu.vector_store %arg6[%c0_17, %c0_18, %c0_19], %18 {strides = array<i32>} : memref<1x8x128xf32, #tpu.memory_space<vmem>>, vector<1x8x128xf32>,
    return
  }
  func.func @transform_0(%arg0: i32, %arg1: i32) -> (i32, i32) {
    %c1_i32 = arith.constant 1 : i32
    %0 = arith.muli %arg0, %c1_i32 : i32
    %1 = arith.addi %0, %arg1 : i32
    %c0_i32 = arith.constant 0 : i32
    %c0_i32_0 = arith.constant 0 : i32
    return %1, %c0_i32 : i32, i32
  }
  func.func @transform_1(%arg0: i32, %arg1: i32) -> (i32, i32) {
    %c0_i32 = arith.constant 0 : i32
    %c0_i32_0 = arith.constant 0 : i32
    %c0_i32_1 = arith.constant 0 : i32
    return %c0_i32, %c0_i32_0 : i32, i32
  }
  func.func @transform_2(%arg0: i32, %arg1: i32) -> (i32, i32) {
    %c1_i32 = arith.constant 1 : i32
    %0 = arith.muli %arg0, %c1_i32 : i32
    %1 = arith.addi %0, %arg1 : i32
    %c0_i32 = arith.constant 0 : i32
    %c0_i32_0 = arith.constant 0 : i32
    return %1, %c0_i32 : i32, i32
  }
  func.func @transform_3(%arg0: i32, %arg1: i32) -> (i32, i32, i32) {
    %c0_i32 = arith.constant 0 : i32
    %c0_i32_0 = arith.constant 0 : i32
    %c0_i32_1 = arith.constant 0 : i32
    return %arg0, %c0_i32, %c0_i32_0 : i32, i32, i32
  }
  func.func @transform_4(%arg0: i32, %arg1: i32) -> (i32, i32, i32) {
    %c0_i32 = arith.constant 0 : i32
    %c0_i32_0 = arith.constant 0 : i32
    %c0_i32_1 = arith.constant 0 : i32
    return %arg0, %c0_i32, %c0_i32_0 : i32, i32, i32
  }
}

</mosaic_0001>

<llo_original>
// kernel: down_sampling_block.1
$region0: #{down_sampling_block.1}
  #allocation0 [shape = 'u32[]', space=smem, size = 0x4, offset = 0x4, fixed_abs, tag = 'smem constant byte address 0x4 - core index']
  #allocation1 [shape = 'u32[144,128]{1,0:T(1,128)}', space=vmem, size = 0x12000, scoped, tag = 'internal scratch']
  %s0 = inlined_call_operand.vmem [shape: bf16[128,64], index: 0, kind: input, shape index: {}]
  %s1 = inlined_call_operand.vmem [shape: bf16[64,128], index: 1, kind: input, shape index: {}]
  %s2 = inlined_call_operand.vmem [shape: bf16[128,128], index: 2, kind: output, shape index: {0}]
  %s3 = inlined_call_operand.vmem [shape: f32[1,8,128], index: 3, kind: output, shape index: {1}]
  %s4 = inlined_call_operand.vmem [shape: f32[1,8,128], index: 4, kind: output, shape index: {2}]
  %5 = xla_tuple %s2, %s3, %s4
  %s6 = sld [smem:[#allocation0]]
  $region38: #{down_sampling_block.1} parent=0
    _
  %s8 = ssub.s32 1, %s6
  %s9 = scalar_select 0, %s8, %s6
  // Predicated region
  $region2: #{down_sampling_block.1} parent=0 // pred_check
    _
  $region3: #{down_sampling_block.1} parent=0 // pred_check_branch
    %11 = sbr.rel (0) target = $region5
  $region4: #{down_sampling_block.1} parent=0 // pred_region
    %s12 = sadd.s32 0, 0
    %s13 = smul.u32 16, %s12
    %p14 = scmp.lt.s32.totalorder %s13, 15
    %s15 = scalar_select %p14, %s13, 15
    %s16 = smul.addr %s15, 4
    %s17 = scalar_lea.vmem %s0, %s16
    %s18 = sadd.s32 0, 0
    %s19 = smul.u32 16, %s18
  $region5: #{down_sampling_block.1} parent=0 // pred_fallthru
    _
  // Predicated region
  $region6: #{down_sampling_block.1} parent=0 // pred_check
    _
  $region7: #{down_sampling_block.1} parent=0 // pred_check_branch
    %21 = sbr.rel (0) target = $region9
  $region8: #{down_sampling_block.1} parent=0 // pred_region
    _
  $region9: #{down_sampling_block.1} parent=0 // pred_fallthru
    _
  %s22 = sadd.s32 0, 0
  %s23 = smul.u32 16, %s22
  %p24 = scmp.lt.s32.totalorder %s23, 15
  %s25 = scalar_select %p24, %s23, 15
  %s26 = smul.addr %s25, 4
  %s27 = scalar_lea.vmem %s0, %s26
  %s28 = sadd.s32 0, 0
  %s29 = smul.u32 16, %s28
  %p30 = scmp.lt.s32.totalorder %s29, 15
  %s31 = scalar_select %p30, %s29, 15
  %s32 = smul.addr %s31, 4
  %s33 = scalar_lea.vmem %s2, %s32
  %s34 = sadd.s32 0, 0
  %s35 = smul.u32 16, %s34
  %p36 = scmp.lt.s32.totalorder %s35, 15
  %s37 = scalar_select %p36, %s35, 15
  %s38 = smul.addr %s37, 4
  %s39 = scalar_lea.vmem %s0, %s38
  %s40 = sadd.s32 0, 0
  %s41 = smul.u32 16, %s40
  %s42 = sadd.s32 0, 0
  %s43 = smul.u32 16, %s42
  %p44 = scmp.lt.s32.totalorder %s43, 15
  %s45 = scalar_select %p44, %s43, 15
  %s46 = smul.addr %s45, 4
  %s47 = scalar_lea.vmem %s2, %s46
  %s48 = sadd.s32 0, 0
  %s49 = smul.u32 16, %s48
  %p51 = scmp.eq.s32.totalorder 0, 0
  // Predicated region
  $region10: #{down_sampling_block.1} parent=0 // pred_check
    %p52 = pneg %p51
  $region11: #{down_sampling_block.1} parent=0 // pred_check_branch
    %54 = sbr.rel (%p52) target = $region13
  $region12: #{down_sampling_block.1} parent=0 // pred_region
    %55 = vst [vmem:[%s3] sm:$0xff] 0.0
    %56 = vst [vmem:[%s4] sm:$0xff] 0.0
  $region13: #{down_sampling_block.1} parent=0 // pred_fallthru
    _
  %v57 = vld [vmem:[%s39] sm:$0xf]
  %v58 = vld [vmem:[%s39 + $0x4] sm:$0xf]
  %v59 = vld [vmem:[%s39 + $0x8] sm:$0xf]
  %v60 = vld [vmem:[%s39 + $0xc] sm:$0xf]
  %v61 = vld [vmem:[%s39 + $0x10] sm:$0xf]
  %v62 = vld [vmem:[%s39 + $0x14] sm:$0xf]
  %v63 = vld [vmem:[%s39 + $0x18] sm:$0xf]
  %v64 = vld [vmem:[%s39 + $0x1c] sm:$0xf]
  %v65 = vld [vmem:[%s39 + $0x20] sm:$0xf]
  %v66 = vld [vmem:[%s39 + $0x24] sm:$0xf]
  %v67 = vld [vmem:[%s39 + $0x28] sm:$0xf]
  %v68 = vld [vmem:[%s39 + $0x2c] sm:$0xf]
  %v69 = vld [vmem:[%s39 + $0x30] sm:$0xf]
  %v70 = vld [vmem:[%s39 + $0x34] sm:$0xf]
  %v71 = vld [vmem:[%s39 + $0x38] sm:$0xf]
  %v72 = vld [vmem:[%s39 + $0x3c] sm:$0xf]
  %v73 = vld [vmem:[%s1] sm:$0xf]
  %v74 = vld [vmem:[%s1 + $0x4] sm:$0xf]
  %v75 = vld [vmem:[%s1 + $0x8] sm:$0xf]
  %v76 = vld [vmem:[%s1 + $0xc] sm:$0xf]
  %v77 = vld [vmem:[%s1 + $0x10] sm:$0xf]
  %v78 = vld [vmem:[%s1 + $0x14] sm:$0xf]
  %v79 = vld [vmem:[%s1 + $0x18] sm:$0xf]
  %v80 = vld [vmem:[%s1 + $0x1c] sm:$0xf]
  %v97 = vunpack.c.l.b16 %v57
  %v98 = vunpack.c.l.b16 %v58
  %v99 = vunpack.c.l.b16 %v59
  %v100 = vunpack.c.l.b16 %v60
  %v101 = vunpack.c.l.b16 %v61
  %v102 = vunpack.c.l.b16 %v62
  %v103 = vunpack.c.l.b16 %v63
  %v104 = vunpack.c.l.b16 %v64
  %v105 = vunpack.c.l.b16 %v65
  %v106 = vunpack.c.l.b16 %v66
  %v107 = vunpack.c.l.b16 %v67
  %v108 = vunpack.c.l.b16 %v68
  %v109 = vunpack.c.l.b16 %v69
  %v110 = vunpack.c.l.b16 %v70
  %v111 = vunpack.c.l.b16 %v71
  %v112 = vunpack.c.l.b16 %v72
  %v113 = vpack.c.b16 %v98, %v97
  %v114 = vpack.c.b16 %v100, %v99
  %v115 = vpack.c.b16 %v102, %v101
  %v116 = vpack.c.b16 %v104, %v103
  %v117 = vpack.c.b16 %v106, %v105
  %v118 = vpack.c.b16 %v108, %v107
  %v119 = vpack.c.b16 %v110, %v109
  %v120 = vpack.c.b16 %v112, %v111
  %v129 = vunpack.c.l.b16 %v73
  %v130 = vunpack.c.l.b16 %v74
  %v131 = vunpack.c.l.b16 %v75
  %v132 = vunpack.c.l.b16 %v76
  %v133 = vunpack.c.l.b16 %v77
  %v134 = vunpack.c.l.b16 %v78
  %v135 = vunpack.c.l.b16 %v79
  %v136 = vunpack.c.l.b16 %v80
  %v137 = vpack.c.b16 %v130, %v129
  %v138 = vpack.c.b16 %v132, %v131
  %v139 = vpack.c.b16 %v134, %v133
  %v140 = vpack.c.b16 %v136, %v135
  %vm145 = vcmask 523264
  %v147 = vsel %vm145, %v113, 0
  %v150 = vsel %vm145, %v114, 0
  %v153 = vsel %vm145, %v115, 0
  %v156 = vsel %vm145, %v116, 0
  %v159 = vsel %vm145, %v117, 0
  %v162 = vsel %vm145, %v118, 0
  %v165 = vsel %vm145, %v119, 0
  %v168 = vsel %vm145, %v120, 0
  %170 = vmatprep.subr.bf16.mxu0 0
  %171 = vmatpush1.bf16.msra.mxu0 0
  %172 = vmatprep.subr.bf16.mxu0 0
  %173 = vmatpush1.bf16.msra.mxu0 0
  %174 = vmatprep.subr.bf16.mxu0 0
  %175 = vmatpush1.bf16.msra.mxu0 0
  %176 = vmatprep.subr.bf16.mxu0 0
  %177 = vmatpush1.bf16.msra.mxu0 0
  %178 = vmatprep.subr.bf16.mxu0 0
  %179 = vmatpush1.bf16.msra.mxu0 %v140
  %180 = vmatprep.subr.bf16.mxu0 0
  %181 = vmatpush1.bf16.msra.mxu0 %v139
  %182 = vmatprep.subr.bf16.mxu0 0
  %183 = vmatpush1.bf16.msra.mxu0 %v138
  %184 = vmatprep.subr.bf16.mxu0 0
  %185 = vmatpush1.bf16.msra.mxu0 %v137
  %186 = vmatprep.subr.bf16.mxu0 0
  %187 = vmatpush2.bf16.msra.mxu0 0
  %188 = vmatprep.subr.bf16.mxu0 0
  %189 = vmatpush2.bf16.msra.mxu0 0
  %190 = vmatprep.subr.bf16.mxu0 0
  %191 = vmatpush2.bf16.msra.mxu0 0
  %192 = vmatprep.subr.bf16.mxu0 0
  %193 = vmatpush2.bf16.msra.mxu0 0
  %194 = vmatprep.subr.bf16.mxu0 0
  %195 = vmatpush2.bf16.msra.mxu0 0
  %196 = vmatprep.subr.bf16.mxu0 0
  %197 = vmatpush2.bf16.msra.mxu0 0
  %198 = vmatprep.subr.bf16.mxu0 0
  %199 = vmatpush2.bf16.msra.mxu0 0
  %200 = vmatprep.subr.bf16.mxu0 0
  %201 = vmatpush2.bf16.msra.mxu0 0
  %202 = vmatprep.mubr.bf16.mxu0 0
  %203 = vmatmul.mubr.bf16.gmra.mxu0 %v147
  %v204 = vpop.f32.mrf.mxu0
  %v205 = vadd.f32 0.0, %v204
  %v206 = vpop.f32.mrf.mxu0
  %v207 = vpop.f32.mrf.mxu0
  %v208 = vadd.f32 0.0, %v207
  %v209 = vpop.f32.mrf.mxu0
  %210 = vmatprep.mubr.bf16.mxu0 0
  %211 = vmatmul.mubr.bf16.gmra.mxu0 %v150
  %v212 = vpop.f32.mrf.mxu0
  %v213 = vadd.f32 0.0, %v212
  %v214 = vpop.f32.mrf.mxu0
  %v215 = vpop.f32.mrf.mxu0
  %v216 = vadd.f32 0.0, %v215
  %v217 = vpop.f32.mrf.mxu0
  %218 = vmatprep.mubr.bf16.mxu0 0
  %219 = vmatmul.mubr.bf16.gmra.mxu0 %v153
  %v220 = vpop.f32.mrf.mxu0
  %v221 = vadd.f32 0.0, %v220
  %v222 = vpop.f32.mrf.mxu0
  %v223 = vpop.f32.mrf.mxu0
  %v224 = vadd.f32 0.0, %v223
  %v225 = vpop.f32.mrf.mxu0
  %226 = vmatprep.mubr.bf16.mxu0 0
  %227 = vmatmul.mubr.bf16.gmra.mxu0 %v156
  %v228 = vpop.f32.mrf.mxu0
  %v229 = vadd.f32 0.0, %v228
  %v230 = vpop.f32.mrf.mxu0
  %v231 = vpop.f32.mrf.mxu0
  %v232 = vadd.f32 0.0, %v231
  %v233 = vpop.f32.mrf.mxu0
  %234 = vmatprep.mubr.bf16.mxu0 0
  %235 = vmatmul.mubr.bf16.gmra.mxu0 %v159
  %v236 = vpop.f32.mrf.mxu0
  %v237 = vadd.f32 0.0, %v236
  %v238 = vpop.f32.mrf.mxu0
  %v239 = vpop.f32.mrf.mxu0
  %v240 = vadd.f32 0.0, %v239
  %v241 = vpop.f32.mrf.mxu0
  %242 = vmatprep.mubr.bf16.mxu0 0
  %243 = vmatmul.mubr.bf16.gmra.mxu0 %v162
  %v244 = vpop.f32.mrf.mxu0
  %v245 = vadd.f32 0.0, %v244
  %v246 = vpop.f32.mrf.mxu0
  %v247 = vpop.f32.mrf.mxu0
  %v248 = vadd.f32 0.0, %v247
  %v249 = vpop.f32.mrf.mxu0
  %250 = vmatprep.mubr.bf16.mxu0 0
  %251 = vmatmul.mubr.bf16.gmra.mxu0 %v165
  %v252 = vpop.f32.mrf.mxu0
  %v253 = vadd.f32 0.0, %v252
  %v254 = vpop.f32.mrf.mxu0
  %v255 = vpop.f32.mrf.mxu0
  %v256 = vadd.f32 0.0, %v255
  %v257 = vpop.f32.mrf.mxu0
  %258 = vmatprep.mubr.bf16.mxu0 0
  %259 = vmatmul.mubr.bf16.gmra.mxu0 %v168
  %v260 = vpop.f32.mrf.mxu0
  %v261 = vadd.f32 0.0, %v260
  %v262 = vpop.f32.mrf.mxu0
  %v263 = vpop.f32.mrf.mxu0
  %v264 = vadd.f32 0.0, %v263
  %v265 = vpop.f32.mrf.mxu0
  %266 = vdwg.mxu0
  %v267 = vpack.c.bf16 %v208, %v205
  %v268 = vpack.c.bf16 %v216, %v213
  %v269 = vpack.c.bf16 %v224, %v221
  %v270 = vpack.c.bf16 %v232, %v229
  %v271 = vpack.c.bf16 %v240, %v237
  %v272 = vpack.c.bf16 %v248, %v245
  %v273 = vpack.c.bf16 %v256, %v253
  %v274 = vpack.c.bf16 %v264, %v261
  %v283 = vunpack.c.l.b16 %v267
  %v284 = vunpack.c.h.b16 %v267
  %v285 = vunpack.c.l.b16 %v268
  %v286 = vunpack.c.h.b16 %v268
  %v287 = vunpack.c.l.b16 %v269
  %v288 = vunpack.c.h.b16 %v269
  %v289 = vunpack.c.l.b16 %v270
  %v290 = vunpack.c.h.b16 %v270
  %v291 = vunpack.c.l.b16 %v271
  %v292 = vunpack.c.h.b16 %v271
  %v293 = vunpack.c.l.b16 %v272
  %v294 = vunpack.c.h.b16 %v272
  %v295 = vunpack.c.l.b16 %v273
  %v296 = vunpack.c.h.b16 %v273
  %v297 = vunpack.c.l.b16 %v274
  %v298 = vunpack.c.h.b16 %v274
  %v299 = vpack.c.b16 %v283, %v283
  %v300 = vpack.c.b16 %v284, %v284
  %v301 = vpack.c.b16 %v285, %v285
  %v302 = vpack.c.b16 %v286, %v286
  %v303 = vpack.c.b16 %v287, %v287
  %v304 = vpack.c.b16 %v288, %v288
  %v305 = vpack.c.b16 %v289, %v289
  %v306 = vpack.c.b16 %v290, %v290
  %v307 = vpack.c.b16 %v291, %v291
  %v308 = vpack.c.b16 %v292, %v292
  %v309 = vpack.c.b16 %v293, %v293
  %v310 = vpack.c.b16 %v294, %v294
  %v311 = vpack.c.b16 %v295, %v295
  %v312 = vpack.c.b16 %v296, %v296
  %v313 = vpack.c.b16 %v297, %v297
  %v314 = vpack.c.b16 %v298, %v298
  %331 = vst [vmem:[%s47] sm:$0xf] %v299
  %332 = vst [vmem:[%s47 + $0x4] sm:$0xf] %v300
  %333 = vst [vmem:[%s47 + $0x8] sm:$0xf] %v301
  %334 = vst [vmem:[%s47 + $0xc] sm:$0xf] %v302
  %335 = vst [vmem:[%s47 + $0x10] sm:$0xf] %v303
  %336 = vst [vmem:[%s47 + $0x14] sm:$0xf] %v304
  %337 = vst [vmem:[%s47 + $0x18] sm:$0xf] %v305
  %338 = vst [vmem:[%s47 + $0x1c] sm:$0xf] %v306
  %339 = vst [vmem:[%s47 + $0x20] sm:$0xf] %v307
  %340 = vst [vmem:[%s47 + $0x24] sm:$0xf] %v308
  %341 = vst [vmem:[%s47 + $0x28] sm:$0xf] %v309
  %342 = vst [vmem:[%s47 + $0x2c] sm:$0xf] %v310
  %343 = vst [vmem:[%s47 + $0x30] sm:$0xf] %v311
  %344 = vst [vmem:[%s47 + $0x34] sm:$0xf] %v312
  %345 = vst [vmem:[%s47 + $0x38] sm:$0xf] %v313
  %346 = vst [vmem:[%s47 + $0x3c] sm:$0xf] %v314
  %v347 = vld [vmem:[%s3] sm:$0xff]
  %v348 = vadd.f32 %v205, %v208
  %v349 = vadd.f32 %v348, %v213
  %v350 = vadd.f32 %v349, %v216
  %v351 = vadd.f32 %v350, %v221
  %v352 = vadd.f32 %v351, %v224
  %v353 = vadd.f32 %v352, %v229
  %v354 = vadd.f32 %v353, %v232
  %v355 = vadd.f32 %v354, %v237
  %v356 = vadd.f32 %v355, %v240
  %v357 = vadd.f32 %v356, %v245
  %v358 = vadd.f32 %v357, %v248
  %v359 = vadd.f32 %v358, %v253
  %v360 = vadd.f32 %v359, %v256
  %v361 = vadd.f32 %v360, %v261
  %v362 = vadd.f32 %v361, %v264
  %v363 = vadd.f32 %v347, %v362
  %364 = vst [vmem:[%s3] sm:$0xff] %v363
  %v365 = vld [vmem:[%s4] sm:$0xff]
  %v366 = vmul.f32 %v205, %v205
  %v367 = vmul.f32 %v208, %v208
  %v368 = vmul.f32 %v213, %v213
  %v369 = vmul.f32 %v216, %v216
  %v370 = vmul.f32 %v221, %v221
  %v371 = vmul.f32 %v224, %v224
  %v372 = vmul.f32 %v229, %v229
  %v373 = vmul.f32 %v232, %v232
  %v374 = vmul.f32 %v237, %v237
  %v375 = vmul.f32 %v240, %v240
  %v376 = vmul.f32 %v245, %v245
  %v377 = vmul.f32 %v248, %v248
  %v378 = vmul.f32 %v253, %v253
  %v379 = vmul.f32 %v256, %v256
  %v380 = vmul.f32 %v261, %v261
  %v381 = vmul.f32 %v264, %v264
  %v382 = vadd.f32 %v366, %v367
  %v383 = vadd.f32 %v382, %v368
  %v384 = vadd.f32 %v383, %v369
  %v385 = vadd.f32 %v384, %v370
  %v386 = vadd.f32 %v385, %v371
  %v387 = vadd.f32 %v386, %v372
  %v388 = vadd.f32 %v387, %v373
  %v389 = vadd.f32 %v388, %v374
  %v390 = vadd.f32 %v389, %v375
  %v391 = vadd.f32 %v390, %v376
  %v392 = vadd.f32 %v391, %v377
  %v393 = vadd.f32 %v392, %v378
  %v394 = vadd.f32 %v393, %v379
  %v395 = vadd.f32 %v394, %v380
  %v396 = vadd.f32 %v395, %v381
  %v397 = vadd.f32 %v365, %v396
  %398 = vst [vmem:[%s4] sm:$0xff] %v397
  %s399 = sadd.s32 0, 0
  %s400 = smul.u32 16, %s399
  %p401 = scmp.lt.s32.totalorder %s400, 15
  %s402 = scalar_select %p401, %s400, 15
  %s403 = smul.addr %s402, 4
  %s404 = scalar_lea.vmem %s2, %s403
  // Predicated region
  $region14: #{down_sampling_block.1} parent=0 // pred_check
    _
  $region15: #{down_sampling_block.1} parent=0 // pred_check_branch
    %406 = sbr.rel (0) target = $region17
  $region16: #{down_sampling_block.1} parent=0 // pred_region
    %s407 = sadd.s32 0, 0
    %s408 = smul.u32 16, %s407
  $region17: #{down_sampling_block.1} parent=0 // pred_fallthru
    _
  // Predicated region
  $region18: #{down_sampling_block.1} parent=0 // pred_check
    _
  $region19: #{down_sampling_block.1} parent=0 // pred_check_branch
    %410 = sbr.rel (0) target = $region21
  $region20: #{down_sampling_block.1} parent=0 // pred_region
    _
  $region21: #{down_sampling_block.1} parent=0 // pred_fallthru
    _
  // Predicated region
  $region22: #{down_sampling_block.1} parent=0 // pred_check
    _
  $region23: #{down_sampling_block.1} parent=0 // pred_check_branch
    %412 = sbr.rel (0) target = $region25
  $region24: #{down_sampling_block.1} parent=0 // pred_region
    _
  $region25: #{down_sampling_block.1} parent=0 // pred_fallthru
    _
  // Predicated region
  $region26: #{down_sampling_block.1} parent=0 // pred_check
    _
  $region27: #{down_sampling_block.1} parent=0 // pred_check_branch
    %414 = sbr.rel (0) target = $region29
  $region28: #{down_sampling_block.1} parent=0 // pred_region
    %s415 = sadd.s32 0, 0
    %s416 = smul.u32 16, %s415
    %p417 = scmp.lt.s32.totalorder %s416, 15
    %s418 = scalar_select %p417, %s416, 15
    %s419 = smul.addr %s418, 4
    %s420 = scalar_lea.vmem %s2, %s419
  $region29: #{down_sampling_block.1} parent=0 // pred_fallthru
    _
  // Predicated region
  $region30: #{down_sampling_block.1} parent=0 // pred_check
    _
  $region31: #{down_sampling_block.1} parent=0 // pred_check_branch
    %422 = sbr.rel (0) target = $region33
  $region32: #{down_sampling_block.1} parent=0 // pred_region
    _
  $region33: #{down_sampling_block.1} parent=0 // pred_fallthru
    _
  // Predicated region
  $region34: #{down_sampling_block.1} parent=0 // pred_check
    _
  $region35: #{down_sampling_block.1} parent=0 // pred_check_branch
    %424 = sbr.rel (0) target = $region37
  $region36: #{down_sampling_block.1} parent=0 // pred_region
    _
  $region37: #{down_sampling_block.1} parent=0 // pred_fallthru
    _

</llo_original>
